<compile_context>
chip_gen: v7x
topology: tpu7x:2x2x1
jax: 0.10.0
libtpu: 0.0.40
codegen_flags: <defaults>
</compile_context>

<pallas_src>
import functools

import jax
import jax.numpy as jnp
from jax import lax
from jax.experimental import pallas as pl
from jax.experimental.pallas import tpu as pltpu

LN_EPS = 1e-5  # PyTorch nn.LayerNorm default


def _round_up(x: int, m: int) -> int:
    return ((x + m - 1) // m) * m


def _vmem_limit_bytes() -> int:
    """Generation-aware scoped-VMEM request with headroom for Mosaic scratch."""
    cap = 64 * 1024 * 1024
    try:
        info = pltpu.get_tpu_info()
        cap = int(getattr(info, "vmem_capacity_bytes", cap))
    except Exception:
        pass
    # ~15% headroom; never request more than 112 MiB even on 128 MiB parts.
    return min(int(cap * 0.85), 112 * 1024 * 1024)


def _block_spec(shape, index_map, buffered=None):
    """BlockSpec with optional pipeline_mode, falling back if unsupported."""
    if buffered is not None:
        try:
            return pl.BlockSpec(shape, index_map, pipeline_mode=pl.Buffered(buffered))
        except TypeError:
            pass
    return pl.BlockSpec(shape, index_map)


def residual_mlp_kernel(x_ref, w1_ref, b1_ref, w2_ref, b2_ref, g_ref, beta_ref,
                        o_ref, acc_ref, *, d_real: int, d_pad: int):
    k = pl.program_id(1)

    @pl.when(k == 0)
    def _():
        acc_ref[...] = jnp.zeros_like(acc_ref)

    # Matmuls in the input dtype (bf16 stays bf16 -> full-rate MXU); f32 accumulation.
    x = x_ref[...]                                                      # (TM, Dp)

    # Linear1 chunk + ReLU over this hidden slice.
    h = jnp.dot(x, w1_ref[...], preferred_element_type=jnp.float32)    # (TM, th) f32
    h = jnp.maximum(h + b1_ref[...].astype(jnp.float32), 0.0)

    # Partial Linear2 contribution accumulated in f32 VMEM scratch.
    acc_ref[...] += jnp.dot(h.astype(x.dtype), w2_ref[...],
                            preferred_element_type=jnp.float32)         # (TM, Dp) f32

    @pl.when(k == pl.num_programs(1) - 1)
    def _():
        # bias + residual (padded feature lanes of y are exactly 0: zero-padded
        # W2 columns / b2 / x).
        y = acc_ref[...] + b2_ref[...].astype(jnp.float32) + x.astype(jnp.float32)

        # LayerNorm over the d_real true lanes (biased variance, matching PyTorch).
        inv_d = 1.0 / float(d_real)
        mean = jnp.sum(y, axis=-1, keepdims=True) * inv_d
        centered = y - mean
        sq = jnp.sum(centered * centered, axis=-1, keepdims=True)
        if d_pad != d_real:
            # padded lanes contribute (-mean)^2 each -> subtract them algebraically.
            sq = sq - float(d_pad - d_real) * (mean * mean)
        y_n = centered * lax.rsqrt(sq * inv_d + LN_EPS)
        out = y_n * g_ref[...].astype(jnp.float32) + beta_ref[...].astype(jnp.float32)
        o_ref[...] = out.astype(o_ref.dtype)


@functools.partial(jax.jit, static_argnames=("block_rows", "block_hidden"))
def residual_mlp_block(x, w1, b1, w2, b2, gamma, beta, *,
                       block_rows: int = 512, block_hidden: int = 2048):
    """x: (batch, seq_len, d_model) -> (batch, seq_len, d_model)."""
    B, S, D = x.shape
    H = w1.shape[1]
    N = B * S

    # Lane-dense feature dims; MXU-friendly hidden tile (multiple of 256 when possible).
    D_pad = _round_up(D, 128)
    H_lane = _round_up(H, 128)
    th = _round_up(min(block_hidden, H_lane), 128)
    H_pad = _round_up(H_lane, th)
    kt = H_pad // th

    # Sublane-aligned row tile (multiple of 256 at the default size for v6e/v7x MXU).
    row_align = max(8, 32 // x.dtype.itemsize)          # 8 for f32, 16 for bf16
    tm = _round_up(min(block_rows, _round_up(N, row_align)), row_align)
    N_pad = _round_up(N, tm)

    x2 = x.reshape(N, D)
    if (N_pad, D_pad) != (N, D):
        x2 = jnp.pad(x2, ((0, N_pad - N), (0, D_pad - D)))
    w1p = jnp.pad(w1, ((0, D_pad - D), (0, H_pad - H))) if (D_pad, H_pad) != (D, H) else w1
    w2p = jnp.pad(w2, ((0, H_pad - H), (0, D_pad - D))) if (H_pad, D_pad) != (H, D) else w2
    b1p = jnp.pad(b1, (0, H_pad - H)).reshape(1, H_pad)
    b2p = jnp.pad(b2, (0, D_pad - D)).reshape(1, D_pad)
    g_p = jnp.pad(gamma, (0, D_pad - D)).reshape(1, D_pad)
    be_p = jnp.pad(beta, (0, D_pad - D)).reshape(1, D_pad)

    kernel = functools.partial(residual_mlp_kernel, d_real=D, d_pad=D_pad)

    # Single-buffer constant-index params; single-buffer weights too when the hidden
    # grid has only one step (no DMA overlap to gain -> halve their VMEM footprint).
    w_buf = 1 if kt == 1 else 2
    in_specs = [
        _block_spec((tm, D_pad), lambda i, k: (i, 0)),                # x tile
        _block_spec((D_pad, th), lambda i, k: (0, k), buffered=w_buf),  # W1 chunk
        _block_spec((1, th), lambda i, k: (0, k), buffered=w_buf),      # b1 chunk
        _block_spec((th, D_pad), lambda i, k: (k, 0), buffered=w_buf),  # W2 chunk
        _block_spec((1, D_pad), lambda i, k: (0, 0), buffered=1),       # b2
        _block_spec((1, D_pad), lambda i, k: (0, 0), buffered=1),       # gamma
        _block_spec((1, D_pad), lambda i, k: (0, 0), buffered=1),       # beta
    ]

    act_bytes = x.dtype.itemsize
    w_bytes = w1.dtype.itemsize
    n_row_tiles = N_pad // tm
    cost = pl.CostEstimate(
        flops=4 * N_pad * D_pad * H_pad + 10 * N_pad * D_pad,
        transcendentals=N_pad,
        bytes_accessed=(2 * N_pad * D_pad * act_bytes
                        + 2 * n_row_tiles * D_pad * H_pad * w_bytes),
    )

    out2 = pl.pallas_call(
        kernel,
        out_shape=jax.ShapeDtypeStruct((N_pad, D_pad), x.dtype),
        grid_spec=pltpu.PrefetchScalarGridSpec(
            num_scalar_prefetch=0,
            grid=(n_row_tiles, kt),                       # hidden (reduction) axis last
            in_specs=in_specs,
            out_specs=pl.BlockSpec((tm, D_pad), lambda i, k: (i, 0)),
            scratch_shapes=[pltpu.VMEM((tm, D_pad), jnp.float32)],   # Linear2 accumulator
        ),
        compiler_params=pltpu.CompilerParams(
            dimension_semantics=("parallel", "arbitrary"),
            vmem_limit_bytes=_vmem_limit_bytes(),
        ),
        cost_estimate=cost,
    )(x2, w1p, b1p, w2p, b2p, g_p, be_p)

    return out2[:N, :D].reshape(B, S, D)


def reference(x, w1, b1, w2, b2, gamma, beta):
    h = jnp.maximum(x @ w1 + b1, 0.0)
    y = h @ w2 + b2 + x
    mean = jnp.mean(y, axis=-1, keepdims=True)
    var = jnp.mean((y - mean) ** 2, axis=-1, keepdims=True)
    return (y - mean) / jnp.sqrt(var + LN_EPS) * gamma + beta


if __name__ == "__main__":
    # Small shapes consistent with forward: (batch, seq_len, d_model)
    batch, seq, d_model, hidden = 2, 8, 32, 64

    key = jax.random.PRNGKey(0)
    kx, kw1, kb1, kw2, kb2 = jax.random.split(key, 5)

    x = jax.random.normal(kx, (batch, seq, d_model), dtype=jnp.float32)

    # Deterministic PyTorch-Linear-style uniform(-1/sqrt(fan_in), 1/sqrt(fan_in)) init.
    lim1 = 1.0 / (d_model ** 0.5)
    lim2 = 1.0 / (hidden ** 0.5)
    w1 = jax.random.uniform(kw1, (d_model, hidden), jnp.float32, -lim1, lim1)
    b1 = jax.random.uniform(kb1, (hidden,), jnp.float32, -lim1, lim1)
    w2 = jax.random.uniform(kw2, (hidden, d_model), jnp.float32, -lim2, lim2)
    b2 = jax.random.uniform(kb2, (d_model,), jnp.float32, -lim2, lim2)
    gamma = jnp.ones((d_model,), jnp.float32)   # LayerNorm weight
    beta = jnp.zeros((d_model,), jnp.float32)   # LayerNorm bias

    out = residual_mlp_block(x, w1, b1, w2, b2, gamma, beta)
    out = jax.block_until_ready(out)

    ref = reference(x, w1, b1, w2, b2, gamma, beta)
    assert out.shape == (batch, seq, d_model)
    # f32 path on the MXU (f32 accumulation); tolerance covers MXU rounding.
    assert jnp.allclose(out, ref, atol=1e-4, rtol=1e-4), "mismatch vs reference"

    print("KERNEL_OK")
</pallas_src>

<mosaic_0001>
module attributes {stable_mosaic.version = 11 : i64} {
  func.func @residual_mlp_kernel(%arg0: i32, %arg1: i32, %arg2: memref<16x128xf32, #tpu.memory_space<vmem>>, %arg3: memref<128x128xf32, #tpu.memory_space<vmem>>, %arg4: memref<1x128xf32, #tpu.memory_space<vmem>>, %arg5: memref<128x128xf32, #tpu.memory_space<vmem>>, %arg6: memref<1x128xf32, #tpu.memory_space<vmem>>, %arg7: memref<1x128xf32, #tpu.memory_space<vmem>>, %arg8: memref<1x128xf32, #tpu.memory_space<vmem>>, %arg9: memref<16x128xf32, #tpu.memory_space<vmem>>, %arg10: memref<16x128xf32, #tpu.memory_space<vmem>>) attributes {dimension_semantics = [#tpu.dimension_semantics<parallel>, #tpu.dimension_semantics<arbitrary>], iteration_bounds = array<i64: 1, 1>, scalar_prefetch = 0 : i64, scratch_operands = 1 : i64, tpu.core_type = #tpu.core_type<tc>, window_params = [{transform_indices = @transform_0, window_bounds = array<i64: 16, 128>}, {pipeline_mode = #tpu.pipeline_mode<synchronous>, transform_indices = @transform_1, window_bounds = array<i64: 128, 128>}, {pipeline_mode = #tpu.pipeline_mode<synchronous>, transform_indices = @transform_2, window_bounds = array<i64: 1, 128>}, {pipeline_mode = #tpu.pipeline_mode<synchronous>, transform_indices = @transform_3, window_bounds = array<i64: 128, 128>}, {pipeline_mode = #tpu.pipeline_mode<synchronous>, transform_indices = @transform_4, window_bounds = array<i64: 1, 128>}, {pipeline_mode = #tpu.pipeline_mode<synchronous>, transform_indices = @transform_5, window_bounds = array<i64: 1, 128>}, {pipeline_mode = #tpu.pipeline_mode<synchronous>, transform_indices = @transform_6, window_bounds = array<i64: 1, 128>}, {transform_indices = @transform_7, window_bounds = array<i64: 16, 128>}]} {
    %c0_i32 = arith.constant 0 : i32
    %0 = arith.cmpi eq, %arg1, %c0_i32 : i32
    %1 = arith.extui %0 : i1 to i32
    %c0_i32_0 = arith.constant 0 : i32
    %2 = arith.cmpi ne, %1, %c0_i32_0 : i32
    scf.if %2 {
      %cst_16 = arith.constant 0.000000e+00 : f32
      %19 = vector.broadcast %cst_16 : f32 to vector<16x128xf32>
      %c0_17 = arith.constant 0 : index
      %c0_18 = arith.constant 0 : index
      %20 = vector.load %arg10[%c0_17, %c0_18] : memref<16x128xf32, #tpu.memory_space<vmem>>, vector<16x128xf32>
      tpu.vector_store %arg10[%c0_17, %c0_18], %19 {strides = array<i32>} : memref<16x128xf32, #tpu.memory_space<vmem>>, vector<16x128xf32>,
    } else {
    }
    %c0 = arith.constant 0 : index
    %c0_1 = arith.constant 0 : index
    %3 = vector.load %arg2[%c0, %c0_1] : memref<16x128xf32, #tpu.memory_space<vmem>>, vector<16x128xf32>
    %c0_2 = arith.constant 0 : index
    %c0_3 = arith.constant 0 : index
    %4 = vector.load %arg3[%c0_2, %c0_3] : memref<128x128xf32, #tpu.memory_space<vmem>>, vector<128x128xf32>
    %cst = arith.constant dense<0.000000e+00> : vector<16x128xf32>
    %5 = tpu.matmul %3, %4, %cst {dimension_numbers = #tpu.dot_dimension_numbers<[1], [0], [0], [1], [0, 0, 1, 1], [], []>} : vector<16x128xf32>, vector<128x128xf32>, vector<16x128xf32> -> vector<16x128xf32>
    %c0_4 = arith.constant 0 : index
    %c0_5 = arith.constant 0 : index
    %6 = vector.load %arg4[%c0_4, %c0_5] : memref<1x128xf32, #tpu.memory_space<vmem>>, vector<1x128xf32>
    %7 = vector.broadcast %6 : vector<1x128xf32> to vector<16x128xf32>
    %8 = arith.addf %5, %7 : vector<16x128xf32>
    %cst_6 = arith.constant 0.000000e+00 : f32
    %9 = vector.broadcast %cst_6 : f32 to vector<16x128xf32>
    %10 = arith.maximumf %8, %9 : vector<16x128xf32>
    %c0_7 = arith.constant 0 : index
    %c0_8 = arith.constant 0 : index
    %11 = vector.load %arg10[%c0_7, %c0_8] : memref<16x128xf32, #tpu.memory_space<vmem>>, vector<16x128xf32>
    %c0_9 = arith.constant 0 : index
    %c0_10 = arith.constant 0 : index
    %12 = vector.load %arg5[%c0_9, %c0_10] : memref<128x128xf32, #tpu.memory_space<vmem>>, vector<128x128xf32>
    %cst_11 = arith.constant dense<0.000000e+00> : vector<16x128xf32>
    %13 = tpu.matmul %10, %12, %cst_11 {dimension_numbers = #tpu.dot_dimension_numbers<[1], [0], [0], [1], [0, 0, 1, 1], [], []>} : vector<16x128xf32>, vector<128x128xf32>, vector<16x128xf32> -> vector<16x128xf32>
    %14 = arith.addf %11, %13 : vector<16x128xf32>
    %c0_12 = arith.constant 0 : index
    %c0_13 = arith.constant 0 : index
    %15 = vector.load %arg10[%c0_12, %c0_13] : memref<16x128xf32, #tpu.memory_space<vmem>>, vector<16x128xf32>
    tpu.vector_store %arg10[%c0_12, %c0_13], %14 {strides = array<i32>} : memref<16x128xf32, #tpu.memory_space<vmem>>, vector<16x128xf32>,
    %c0_i32_14 = arith.constant 0 : i32
    %16 = arith.cmpi eq, %arg1, %c0_i32_14 : i32
    %17 = arith.extui %16 : i1 to i32
    %c0_i32_15 = arith.constant 0 : i32
    %18 = arith.cmpi ne, %17, %c0_i32_15 : i32
    scf.if %18 {
      %c0_16 = arith.constant 0 : index
      %c0_17 = arith.constant 0 : index
      %19 = vector.load %arg10[%c0_16, %c0_17] : memref<16x128xf32, #tpu.memory_space<vmem>>, vector<16x128xf32>
      %c0_18 = arith.constant 0 : index
      %c0_19 = arith.constant 0 : index
      %20 = vector.load %arg6[%c0_18, %c0_19] : memref<1x128xf32, #tpu.memory_space<vmem>>, vector<1x128xf32>
      %21 = vector.broadcast %20 : vector<1x128xf32> to vector<16x128xf32>
      %22 = arith.addf %19, %21 : vector<16x128xf32>
      %23 = arith.addf %22, %3 : vector<16x128xf32>
      %cst_20 = arith.constant dense<0.000000e+00> : vector<16xf32>
      %24 = vector.multi_reduction <add>, %23, %cst_20 [1] : vector<16x128xf32> to vector<16xf32>
      %25 = vector.shape_cast %24 : vector<16xf32> to vector<16x1xf32>
      %cst_21 = arith.constant 3.125000e-02 : f32
      %26 = vector.broadcast %cst_21 : f32 to vector<16x1xf32>
      %27 = arith.mulf %25, %26 : vector<16x1xf32>
      %28 = vector.broadcast %27 : vector<16x1xf32> to vector<16x128xf32>
      %29 = arith.subf %23, %28 : vector<16x128xf32>
      %30 = arith.mulf %29, %29 : vector<16x128xf32>
      %cst_22 = arith.constant dense<0.000000e+00> : vector<16xf32>
      %31 = vector.multi_reduction <add>, %30, %cst_22 [1] : vector<16x128xf32> to vector<16xf32>
      %32 = vector.shape_cast %31 : vector<16xf32> to vector<16x1xf32>
      %33 = arith.mulf %27, %27 : vector<16x1xf32>
      %cst_23 = arith.constant 9.600000e+01 : f32
      %34 = vector.broadcast %cst_23 : f32 to vector<16x1xf32>
      %35 = arith.mulf %34, %33 : vector<16x1xf32>
      %36 = arith.subf %32, %35 : vector<16x1xf32>
      %cst_24 = arith.constant 3.125000e-02 : f32
      %37 = vector.broadcast %cst_24 : f32 to vector<16x1xf32>
      %38 = arith.mulf %36, %37 : vector<16x1xf32>
      %cst_25 = arith.constant 9.99999974E-6 : f32
      %39 = vector.broadcast %cst_25 : f32 to vector<16x1xf32>
      %40 = arith.addf %38, %39 : vector<16x1xf32>
      %41 = math.rsqrt %40 : vector<16x1xf32>
      %42 = vector.broadcast %41 : vector<16x1xf32> to vector<16x128xf32>
      %43 = arith.mulf %29, %42 : vector<16x128xf32>
      %c0_26 = arith.constant 0 : index
      %c0_27 = arith.constant 0 : index
      %44 = vector.load %arg7[%c0_26, %c0_27] : memref<1x128xf32, #tpu.memory_space<vmem>>, vector<1x128xf32>
      %45 = vector.broadcast %44 : vector<1x128xf32> to vector<16x128xf32>
      %46 = arith.mulf %43, %45 : vector<16x128xf32>
      %c0_28 = arith.constant 0 : index
      %c0_29 = arith.constant 0 : index
      %47 = vector.load %arg8[%c0_28, %c0_29] : memref<1x128xf32, #tpu.memory_space<vmem>>, vector<1x128xf32>
      %48 = vector.broadcast %47 : vector<1x128xf32> to vector<16x128xf32>
      %49 = arith.addf %46, %48 : vector<16x128xf32>
      %c0_30 = arith.constant 0 : index
      %c0_31 = arith.constant 0 : index
      %50 = vector.load %arg9[%c0_30, %c0_31] : memref<16x128xf32, #tpu.memory_space<vmem>>, vector<16x128xf32>
      tpu.vector_store %arg9[%c0_30, %c0_31], %49 {strides = array<i32>} : memref<16x128xf32, #tpu.memory_space<vmem>>, vector<16x128xf32>,
    } else {
    }
    return
  }
  func.func @transform_0(%arg0: i32, %arg1: i32) -> (i32, i32) {
    %c0_i32 = arith.constant 0 : i32
    %c0_i32_0 = arith.constant 0 : i32
    return %arg0, %c0_i32 : i32, i32
  }
  func.func @transform_1(%arg0: i32, %arg1: i32) -> (i32, i32) {
    %c0_i32 = arith.constant 0 : i32
    %c0_i32_0 = arith.constant 0 : i32
    return %c0_i32, %arg1 : i32, i32
  }
  func.func @transform_2(%arg0: i32, %arg1: i32) -> (i32, i32) {
    %c0_i32 = arith.constant 0 : i32
    %c0_i32_0 = arith.constant 0 : i32
    return %c0_i32, %arg1 : i32, i32
  }
  func.func @transform_3(%arg0: i32, %arg1: i32) -> (i32, i32) {
    %c0_i32 = arith.constant 0 : i32
    %c0_i32_0 = arith.constant 0 : i32
    return %arg1, %c0_i32 : i32, i32
  }
  func.func @transform_4(%arg0: i32, %arg1: i32) -> (i32, i32) {
    %c0_i32 = arith.constant 0 : i32
    %c0_i32_0 = arith.constant 0 : i32
    %c0_i32_1 = arith.constant 0 : i32
    return %c0_i32, %c0_i32_0 : i32, i32
  }
  func.func @transform_5(%arg0: i32, %arg1: i32) -> (i32, i32) {
    %c0_i32 = arith.constant 0 : i32
    %c0_i32_0 = arith.constant 0 : i32
    %c0_i32_1 = arith.constant 0 : i32
    return %c0_i32, %c0_i32_0 : i32, i32
  }
  func.func @transform_6(%arg0: i32, %arg1: i32) -> (i32, i32) {
    %c0_i32 = arith.constant 0 : i32
    %c0_i32_0 = arith.constant 0 : i32
    %c0_i32_1 = arith.constant 0 : i32
    return %c0_i32, %c0_i32_0 : i32, i32
  }
  func.func @transform_7(%arg0: i32, %arg1: i32) -> (i32, i32) {
    %c0_i32 = arith.constant 0 : i32
    %c0_i32_0 = arith.constant 0 : i32
    return %arg0, %c0_i32 : i32, i32
  }
}

</mosaic_0001>

<llo_original>
// kernel: residual_mlp_block.1
$region0: #{residual_mlp_block.1}
  #allocation0 [shape = 'u32[]', space=smem, size = 0x4, offset = 0x4, fixed_abs, tag = 'smem constant byte address 0x4 - core index']
  #allocation1 [shape = 'u32[144,128]{1,0:T(1,128)}', space=vmem, size = 0x12000, scoped, tag = 'internal scratch']
  #allocation2 [shape = 'f32[16,128]{1,0:T(8,128)}', space=vmem, size = 0x2000, scoped, tag = 'scratch operand']
  %s0 = inlined_call_operand.vmem [shape: f32[16,128], index: 0, kind: input, shape index: {}]
  %s1 = inlined_call_operand.vmem [shape: f32[128,128], index: 1, kind: input, shape index: {}]
  %s2 = inlined_call_operand.vmem [shape: f32[1,128], index: 2, kind: input, shape index: {}]
  %s3 = inlined_call_operand.vmem [shape: f32[128,128], index: 3, kind: input, shape index: {}]
  %s4 = inlined_call_operand.vmem [shape: f32[1,128], index: 4, kind: input, shape index: {}]
  %s5 = inlined_call_operand.vmem [shape: f32[1,128], index: 5, kind: input, shape index: {}]
  %s6 = inlined_call_operand.vmem [shape: f32[1,128], index: 6, kind: input, shape index: {}]
  %s7 = inlined_call_operand.vmem [shape: f32[16,128], index: 7, kind: output, shape index: {}]
  %s8 = sld [smem:[#allocation0]]
  $region46: #{residual_mlp_block.1} parent=0
    _
  %s10 = ssub.s32 1, %s8
  %s11 = scalar_select 0, %s10, %s8
  // Predicated region
  $region2: #{residual_mlp_block.1} parent=0 // pred_check
    _
  $region3: #{residual_mlp_block.1} parent=0 // pred_check_branch
    %13 = sbr.rel (0) target = $region5
  $region4: #{residual_mlp_block.1} parent=0 // pred_region
    _
  $region5: #{residual_mlp_block.1} parent=0 // pred_fallthru
    _
  // Predicated region
  $region6: #{residual_mlp_block.1} parent=0 // pred_check
    _
  $region7: #{residual_mlp_block.1} parent=0 // pred_check_branch
    %15 = sbr.rel (0) target = $region9
  $region8: #{residual_mlp_block.1} parent=0 // pred_region
    _
  $region9: #{residual_mlp_block.1} parent=0 // pred_fallthru
    _
  // Predicated region
  $region10: #{residual_mlp_block.1} parent=0 // pred_check
    _
  $region11: #{residual_mlp_block.1} parent=0 // pred_check_branch
    %17 = sbr.rel (0) target = $region13
  $region12: #{residual_mlp_block.1} parent=0 // pred_region
    _
  $region13: #{residual_mlp_block.1} parent=0 // pred_fallthru
    _
  // Predicated region
  $region14: #{residual_mlp_block.1} parent=0 // pred_check
    _
  $region15: #{residual_mlp_block.1} parent=0 // pred_check_branch
    %19 = sbr.rel (0) target = $region17
  $region16: #{residual_mlp_block.1} parent=0 // pred_region
    _
  $region17: #{residual_mlp_block.1} parent=0 // pred_fallthru
    _
  // Predicated region
  $region18: #{residual_mlp_block.1} parent=0 // pred_check
    _
  $region19: #{residual_mlp_block.1} parent=0 // pred_check_branch
    %21 = sbr.rel (0) target = $region21
  $region20: #{residual_mlp_block.1} parent=0 // pred_region
    _
  $region21: #{residual_mlp_block.1} parent=0 // pred_fallthru
    _
  // Predicated region
  $region22: #{residual_mlp_block.1} parent=0 // pred_check
    _
  $region23: #{residual_mlp_block.1} parent=0 // pred_check_branch
    %23 = sbr.rel (0) target = $region25
  $region24: #{residual_mlp_block.1} parent=0 // pred_region
    _
  $region25: #{residual_mlp_block.1} parent=0 // pred_fallthru
    _
  // Predicated region
  $region26: #{residual_mlp_block.1} parent=0 // pred_check
    _
  $region27: #{residual_mlp_block.1} parent=0 // pred_check_branch
    %25 = sbr.rel (0) target = $region29
  $region28: #{residual_mlp_block.1} parent=0 // pred_region
    _
  $region29: #{residual_mlp_block.1} parent=0 // pred_fallthru
    _
  %p26 = scmp.eq.s32.totalorder 0, 0
  // Predicated region
  $region30: #{residual_mlp_block.1} parent=0 // pred_check
    %p27 = pneg %p26
  $region31: #{residual_mlp_block.1} parent=0 // pred_check_branch
    %29 = sbr.rel (%p27) target = $region33
  $region32: #{residual_mlp_block.1} parent=0 // pred_region
    %30 = vst [vmem:[#allocation2] sm:$0xff] 0.0
    %31 = vst [vmem:[#allocation2 + $0x8] sm:$0xff] 0.0
  $region33: #{residual_mlp_block.1} parent=0 // pred_fallthru
    _
  %v32 = vld [vmem:[%s0] sm:$0xff]
  %v33 = vld [vmem:[%s0 + $0x8] sm:$0xff]
  %v34 = vld [vmem:[%s1] sm:$0xff]
  %v35 = vld [vmem:[%s1 + $0x8] sm:$0xff]
  %v36 = vld [vmem:[%s1 + $0x10] sm:$0xff]
  %v37 = vld [vmem:[%s1 + $0x18] sm:$0xff]
  %v38 = vld [vmem:[%s1 + $0x20] sm:$0xff]
  %v39 = vld [vmem:[%s1 + $0x28] sm:$0xff]
  %v40 = vld [vmem:[%s1 + $0x30] sm:$0xff]
  %v41 = vld [vmem:[%s1 + $0x38] sm:$0xff]
  %v42 = vld [vmem:[%s1 + $0x40] sm:$0xff]
  %v43 = vld [vmem:[%s1 + $0x48] sm:$0xff]
  %v44 = vld [vmem:[%s1 + $0x50] sm:$0xff]
  %v45 = vld [vmem:[%s1 + $0x58] sm:$0xff]
  %v46 = vld [vmem:[%s1 + $0x60] sm:$0xff]
  %v47 = vld [vmem:[%s1 + $0x68] sm:$0xff]
  %v48 = vld [vmem:[%s1 + $0x70] sm:$0xff]
  %v49 = vld [vmem:[%s1 + $0x78] sm:$0xff]
  %v50 = vld [vmem:[%s2] sm:$0x1]
  %v52 = vlaneseq
  %v53 = vshrl.u32 %v52, 7
  %v54 = vsub.s32 0, %v53
  %v55 = vrot.slane %v50, %v54
  %57 = vmatprep.subr.mxu0 0.0
  %58 = vmatpush1.msra.mxu0 %v34
  %59 = vmatprep.subr.mxu0 0.0
  %60 = vmatpush1.msra.mxu0 %v35
  %61 = vmatprep.subr.mxu0 0.0
  %62 = vmatpush1.msra.mxu0 %v36
  %63 = vmatprep.subr.mxu0 0.0
  %64 = vmatpush1.msra.mxu0 %v37
  %65 = vmatprep.subr.mxu0 0.0
  %66 = vmatpush1.msra.mxu0 %v38
  %67 = vmatprep.subr.mxu0 0.0
  %68 = vmatpush1.msra.mxu0 %v39
  %69 = vmatprep.subr.mxu0 0.0
  %70 = vmatpush1.msra.mxu0 %v40
  %71 = vmatprep.subr.mxu0 0.0
  %72 = vmatpush1.msra.mxu0 %v41
  %73 = vmatprep.subr.mxu0 0.0
  %74 = vmatpush1.msra.mxu0 %v42
  %75 = vmatprep.subr.mxu0 0.0
  %76 = vmatpush1.msra.mxu0 %v43
  %77 = vmatprep.subr.mxu0 0.0
  %78 = vmatpush1.msra.mxu0 %v44
  %79 = vmatprep.subr.mxu0 0.0
  %80 = vmatpush1.msra.mxu0 %v45
  %81 = vmatprep.subr.mxu0 0.0
  %82 = vmatpush1.msra.mxu0 %v46
  %83 = vmatprep.subr.mxu0 0.0
  %84 = vmatpush1.msra.mxu0 %v47
  %85 = vmatprep.subr.mxu0 0.0
  %86 = vmatpush1.msra.mxu0 %v48
  %87 = vmatprep.subr.mxu0 0.0
  %88 = vmatpush1.msra.mxu0 %v49
  %89 = vmatprep.subr.mxu0 0.0
  %90 = vmatpush1.msra.mxu0 0.0
  %91 = vmatprep.subr.mxu0 0.0
  %92 = vmatpush1.msra.mxu0 0.0
  %93 = vmatprep.subr.mxu0 0.0
  %94 = vmatpush1.msra.mxu0 0.0
  %95 = vmatprep.subr.mxu0 0.0
  %96 = vmatpush1.msra.mxu0 0.0
  %97 = vmatprep.subr.mxu0 0.0
  %98 = vmatpush1.msra.mxu0 0.0
  %99 = vmatprep.subr.mxu0 0.0
  %100 = vmatpush1.msra.mxu0 0.0
  %101 = vmatprep.subr.mxu0 0.0
  %102 = vmatpush1.msra.mxu0 0.0
  %103 = vmatprep.subr.mxu0 0.0
  %104 = vmatpush1.msra.mxu0 0.0
  %105 = vmatprep.subr.mxu0 0.0
  %106 = vmatpush1.msra.mxu0 0.0
  %107 = vmatprep.subr.mxu0 0.0
  %108 = vmatpush1.msra.mxu0 0.0
  %109 = vmatprep.subr.mxu0 0.0
  %110 = vmatpush1.msra.mxu0 0.0
  %111 = vmatprep.subr.mxu0 0.0
  %112 = vmatpush1.msra.mxu0 0.0
  %113 = vmatprep.subr.mxu0 0.0
  %114 = vmatpush1.msra.mxu0 0.0
  %115 = vmatprep.subr.mxu0 0.0
  %116 = vmatpush1.msra.mxu0 0.0
  %117 = vmatprep.subr.mxu0 0.0
  %118 = vmatpush1.msra.mxu0 0.0
  %119 = vmatprep.subr.mxu0 0.0
  %120 = vmatpush1.msra.mxu0 0.0
  %121 = vmatprep.mubr.f32.mxu0 0.0
  %122 = vmatmul.mubr.f32.gmra.mrb[0].mxu0 %v32
  %v123 = vpop.f32.mrb[0].mxu0
  %v124 = vadd.f32 %v55, %v123
  %v125 = vpop.f32.mrb[0].mxu0
  %126 = vmatprep.mubr.f32.mxu0 0.0
  %127 = vmatmul.mubr.f32.gmra.mrb[0].mxu0 %v33
  %v128 = vpop.f32.mrb[0].mxu0
  %v129 = vadd.f32 %v55, %v128
  %v130 = vpop.f32.mrb[0].mxu0
  %131 = vdwg.mxu0
  %v132 = vmax.f32 %v124, 0.0
  %v133 = vmax.f32 %v129, 0.0
  %v134 = vld [vmem:[#allocation2] sm:$0xff]
  %v135 = vld [vmem:[#allocation2 + $0x8] sm:$0xff]
  %v136 = vld [vmem:[%s3] sm:$0xff]
  %v137 = vld [vmem:[%s3 + $0x8] sm:$0xff]
  %v138 = vld [vmem:[%s3 + $0x10] sm:$0xff]
  %v139 = vld [vmem:[%s3 + $0x18] sm:$0xff]
  %v140 = vld [vmem:[%s3 + $0x20] sm:$0xff]
  %v141 = vld [vmem:[%s3 + $0x28] sm:$0xff]
  %v142 = vld [vmem:[%s3 + $0x30] sm:$0xff]
  %v143 = vld [vmem:[%s3 + $0x38] sm:$0xff]
  %v144 = vld [vmem:[%s3 + $0x40] sm:$0xff]
  %v145 = vld [vmem:[%s3 + $0x48] sm:$0xff]
  %v146 = vld [vmem:[%s3 + $0x50] sm:$0xff]
  %v147 = vld [vmem:[%s3 + $0x58] sm:$0xff]
  %v148 = vld [vmem:[%s3 + $0x60] sm:$0xff]
  %v149 = vld [vmem:[%s3 + $0x68] sm:$0xff]
  %v150 = vld [vmem:[%s3 + $0x70] sm:$0xff]
  %v151 = vld [vmem:[%s3 + $0x78] sm:$0xff]
  %152 = vmatprep.subr.mxu0 0.0
  %153 = vmatpush1.msra.mxu0 %v136
  %154 = vmatprep.subr.mxu0 0.0
  %155 = vmatpush1.msra.mxu0 %v137
  %156 = vmatprep.subr.mxu0 0.0
  %157 = vmatpush1.msra.mxu0 %v138
  %158 = vmatprep.subr.mxu0 0.0
  %159 = vmatpush1.msra.mxu0 %v139
  %160 = vmatprep.subr.mxu0 0.0
  %161 = vmatpush1.msra.mxu0 %v140
  %162 = vmatprep.subr.mxu0 0.0
  %163 = vmatpush1.msra.mxu0 %v141
  %164 = vmatprep.subr.mxu0 0.0
  %165 = vmatpush1.msra.mxu0 %v142
  %166 = vmatprep.subr.mxu0 0.0
  %167 = vmatpush1.msra.mxu0 %v143
  %168 = vmatprep.subr.mxu0 0.0
  %169 = vmatpush1.msra.mxu0 %v144
  %170 = vmatprep.subr.mxu0 0.0
  %171 = vmatpush1.msra.mxu0 %v145
  %172 = vmatprep.subr.mxu0 0.0
  %173 = vmatpush1.msra.mxu0 %v146
  %174 = vmatprep.subr.mxu0 0.0
  %175 = vmatpush1.msra.mxu0 %v147
  %176 = vmatprep.subr.mxu0 0.0
  %177 = vmatpush1.msra.mxu0 %v148
  %178 = vmatprep.subr.mxu0 0.0
  %179 = vmatpush1.msra.mxu0 %v149
  %180 = vmatprep.subr.mxu0 0.0
  %181 = vmatpush1.msra.mxu0 %v150
  %182 = vmatprep.subr.mxu0 0.0
  %183 = vmatpush1.msra.mxu0 %v151
  %184 = vmatprep.subr.mxu0 0.0
  %185 = vmatpush1.msra.mxu0 0.0
  %186 = vmatprep.subr.mxu0 0.0
  %187 = vmatpush1.msra.mxu0 0.0
  %188 = vmatprep.subr.mxu0 0.0
  %189 = vmatpush1.msra.mxu0 0.0
  %190 = vmatprep.subr.mxu0 0.0
  %191 = vmatpush1.msra.mxu0 0.0
  %192 = vmatprep.subr.mxu0 0.0
  %193 = vmatpush1.msra.mxu0 0.0
  %194 = vmatprep.subr.mxu0 0.0
  %195 = vmatpush1.msra.mxu0 0.0
  %196 = vmatprep.subr.mxu0 0.0
  %197 = vmatpush1.msra.mxu0 0.0
  %198 = vmatprep.subr.mxu0 0.0
  %199 = vmatpush1.msra.mxu0 0.0
  %200 = vmatprep.subr.mxu0 0.0
  %201 = vmatpush1.msra.mxu0 0.0
  %202 = vmatprep.subr.mxu0 0.0
  %203 = vmatpush1.msra.mxu0 0.0
  %204 = vmatprep.subr.mxu0 0.0
  %205 = vmatpush1.msra.mxu0 0.0
  %206 = vmatprep.subr.mxu0 0.0
  %207 = vmatpush1.msra.mxu0 0.0
  %208 = vmatprep.subr.mxu0 0.0
  %209 = vmatpush1.msra.mxu0 0.0
  %210 = vmatprep.subr.mxu0 0.0
  %211 = vmatpush1.msra.mxu0 0.0
  %212 = vmatprep.subr.mxu0 0.0
  %213 = vmatpush1.msra.mxu0 0.0
  %214 = vmatprep.subr.mxu0 0.0
  %215 = vmatpush1.msra.mxu0 0.0
  %216 = vmatprep.mubr.f32.mxu0 0.0
  %217 = vmatmul.mubr.f32.gmra.mrb[0].mxu0 %v132
  %v218 = vpop.f32.mrb[0].mxu0
  %v219 = vadd.f32 0.0, %v218
  %v220 = vpop.f32.mrb[0].mxu0
  %221 = vmatprep.mubr.f32.mxu0 0.0
  %222 = vmatmul.mubr.f32.gmra.mrb[0].mxu0 %v133
  %v223 = vpop.f32.mrb[0].mxu0
  %v224 = vadd.f32 0.0, %v223
  %v225 = vpop.f32.mrb[0].mxu0
  %226 = vdwg.mxu0
  %v227 = vadd.f32 %v134, %v219
  %v228 = vadd.f32 %v135, %v224
  %229 = vst [vmem:[#allocation2] sm:$0xff] %v227
  %230 = vst [vmem:[#allocation2 + $0x8] sm:$0xff] %v228
  // Predicated region
  $region34: #{residual_mlp_block.1} parent=0 // pred_check
    %p231 = pneg %p26
  $region35: #{residual_mlp_block.1} parent=0 // pred_check_branch
    %233 = sbr.rel (%p231) target = $region37
  $region36: #{residual_mlp_block.1} parent=0 // pred_region
    %v234 = vld [vmem:[#allocation2] sm:$0xff]
    %v235 = vld [vmem:[#allocation2 + $0x8] sm:$0xff]
    %v236 = vld [vmem:[%s4] sm:$0x1]
    %v238 = vlaneseq
    %v239 = vshrl.u32 %v238, 7
    %v240 = vsub.s32 0, %v239
    %v241 = vrot.slane %v236, %v240
    %v243 = vadd.f32 %v234, %v241
    %v244 = vadd.f32 %v235, %v241
    %v245 = vadd.f32 %v243, %v32
    %v246 = vadd.f32 %v244, %v33
    %247 = vadd.xlane.f32.xlu0 %v245
    %v248 = vpop.xlane.xlu0 %247
    %249 = vadd.xlane.f32.xlu0 %v246
    %v250 = vpop.xlane.xlu0 %249
    %v251 = vmul.f32 %v248, 0.03125
    %v252 = vmul.f32 %v250, 0.03125
    %v253 = vsub.f32 %v245, %v251
    %v254 = vsub.f32 %v246, %v252
    %v255 = vmul.f32 %v253, %v253
    %v256 = vmul.f32 %v254, %v254
    %257 = vadd.xlane.f32.xlu0 %v255
    %v258 = vpop.xlane.xlu0 %257
    %259 = vadd.xlane.f32.xlu0 %v256
    %v260 = vpop.xlane.xlu0 %259
    %v261 = vmul.f32 %v251, %v251
    %v262 = vmul.f32 %v252, %v252
    %v263 = vmul.f32 %v261, 96.0
    %v264 = vmul.f32 %v262, 96.0
    %v265 = vsub.f32 %v258, %v263
    %v266 = vsub.f32 %v260, %v264
    %v267 = vmul.f32 %v265, 0.03125
    %v268 = vmul.f32 %v266, 0.03125
    %v269 = vadd.f32 %v267, 1e-05
    %v270 = vadd.f32 %v268, 1e-05
    %v271 = vrsqrt.pop %v269
    %v272 = vrsqrt.pop %v270
    %v273 = vmul.f32 %v253, %v271
    %v274 = vmul.f32 %v254, %v272
    %v275 = vld [vmem:[%s5] sm:$0x1]
    %v277 = vlaneseq
    %v278 = vshrl.u32 %v277, 7
    %v279 = vsub.s32 0, %v278
    %v280 = vrot.slane %v275, %v279
    %v282 = vmul.f32 %v273, %v280
    %v283 = vmul.f32 %v274, %v280
    %v284 = vld [vmem:[%s6] sm:$0x1]
    %v286 = vlaneseq
    %v287 = vshrl.u32 %v286, 7
    %v288 = vsub.s32 0, %v287
    %v289 = vrot.slane %v284, %v288
    %v291 = vadd.f32 %v282, %v289
    %v292 = vadd.f32 %v283, %v289
    %293 = vst [vmem:[%s7] sm:$0xff] %v291
    %294 = vst [vmem:[%s7 + $0x8] sm:$0xff] %v292
  $region37: #{residual_mlp_block.1} parent=0 // pred_fallthru
    _
  // Predicated region
  $region38: #{residual_mlp_block.1} parent=0 // pred_check
    _
  $region39: #{residual_mlp_block.1} parent=0 // pred_check_branch
    %296 = sbr.rel (0) target = $region41
  $region40: #{residual_mlp_block.1} parent=0 // pred_region
    _
  $region41: #{residual_mlp_block.1} parent=0 // pred_fallthru
    _
  // Predicated region
  $region42: #{residual_mlp_block.1} parent=0 // pred_check
    _
  $region43: #{residual_mlp_block.1} parent=0 // pred_check_branch
    %298 = sbr.rel (0) target = $region45
  $region44: #{residual_mlp_block.1} parent=0 // pred_region
    _
  $region45: #{residual_mlp_block.1} parent=0 // pred_fallthru
    _

</llo_original>
